<compile_context>
chip_gen: v7x
topology: tpu7x:2x2x1
jax: 0.10.0
libtpu: 0.0.40
codegen_flags: <defaults>
</compile_context>

<pallas_src>
import functools

import jax
import jax.numpy as jnp
from jax import lax
from jax.experimental import pallas as pl
from jax.experimental.pallas import tpu as pltpu

LANES = 128
SUBLANES = 8


def _focal_values(x, t, alpha, gamma):
    """Elementwise focal loss values, computed in f32."""
    x = x.astype(jnp.float32)
    t = t.astype(jnp.float32)
    # Numerically stable BCE with logits (matches F.binary_cross_entropy_with_logits):
    #   bce = max(x, 0) - x*t + log(1 + exp(-|x|))
    bce = jnp.maximum(x, 0.0) - x * t + jnp.log1p(jnp.exp(-jnp.abs(x)))
    pt = jnp.exp(-bce)
    # bce can round to a tiny negative -> pt marginally > 1; clamp to avoid
    # NaN from pow with a float exponent and keep (1-pt) >= 0.
    u = jnp.maximum(1.0 - pt, 0.0)
    g = float(gamma)
    if g.is_integer():
        # Integer gamma -> multiply chain on the VPU, no extra EUP transcendentals.
        w = lax.integer_pow(u, int(g))
    else:
        w = u ** g
    return (alpha * w) * bce


def _focal_reduce_kernel(x_ref, t_ref, out_ref, *, alpha, gamma, n_valid, tile_r):
    i = pl.program_id(0)
    last = pl.num_programs(0) - 1

    focal = _focal_values(x_ref[...], t_ref[...], alpha, gamma)

    def partial_sum(f):
        # (TILE_R, 128) -> (TILE_R//8, 8, 128) keeps the (8,128) vreg tiling,
        # so the axis-0 sum is pure VPU adds (no cross-lane XLU reduce).
        return f.reshape(tile_r // SUBLANES, SUBLANES, LANES).sum(axis=0)

    @pl.when(i != last)
    def _():
        out_ref[...] = partial_sum(focal)

    @pl.when(i == last)
    def _():
        # Only the last tile can contain padding / out-of-bounds rows: mask by
        # global flat element index.  jnp.where also protects against NaN/Inf
        # garbage in a partially out-of-bounds boundary block.
        base = i * (tile_r * LANES)
        rows = lax.broadcasted_iota(jnp.int32, (tile_r, LANES), 0)
        lanes = lax.broadcasted_iota(jnp.int32, (tile_r, LANES), 1)
        flat = base + rows * LANES + lanes
        out_ref[...] = partial_sum(jnp.where(flat < n_valid, focal, 0.0))


def _focal_elem_kernel(x_ref, t_ref, out_ref, *, alpha, gamma):
    out_ref[...] = _focal_values(x_ref[...], t_ref[...], alpha, gamma).astype(
        out_ref.dtype
    )


def focal_loss(inputs, targets, alpha=0.25, gamma=2.0, reduction="mean",
               tile_rows=1024):
    assert inputs.shape == targets.shape
    assert tile_rows % SUBLANES == 0
    n_valid = inputs.size
    min_chunk = SUBLANES * LANES

    # Keep native dtype (no wrapper-side f32 upcast); cast happens in-kernel.
    x = inputs.reshape(-1)
    t = targets.reshape(-1)

    padded = ((n_valid + min_chunk - 1) // min_chunk) * min_chunk
    pad = padded - n_valid
    if pad:
        # TODO(synk): for very large inputs pad only the final partial chunk
        # instead of a full-array jnp.pad pass.
        x = jnp.pad(x, (0, pad))
        t = jnp.pad(t, (0, pad))

    R = padded // LANES          # multiple of 8
    x2 = x.reshape(R, LANES)
    t2 = t.reshape(R, LANES)

    tile_r = min(tile_rows, R)   # both are multiples of 8
    num_blocks = (R + tile_r - 1) // tile_r
    grid = (num_blocks,)
    in_spec = pl.BlockSpec((tile_r, LANES), lambda i: (i, 0))

    bytes_in = int(x2.size * x2.dtype.itemsize + t2.size * t2.dtype.itemsize)
    compiler_params = pltpu.CompilerParams(
        dimension_semantics=("parallel",),      # per-block outputs -> both TCs on v7x
        vmem_limit_bytes=32 * 1024 * 1024,      # keep 2-deep buffering on v5e defaults
    )

    if reduction in ("mean", "sum"):
        cost = pl.CostEstimate(
            flops=12 * n_valid,
            transcendentals=3 * n_valid,
            bytes_accessed=bytes_in + num_blocks * SUBLANES * LANES * 4,
        )
        partials = pl.pallas_call(
            functools.partial(
                _focal_reduce_kernel,
                alpha=float(alpha), gamma=float(gamma),
                n_valid=n_valid, tile_r=tile_r,
            ),
            out_shape=jax.ShapeDtypeStruct((num_blocks * SUBLANES, LANES), jnp.float32),
            grid_spec=pltpu.PrefetchScalarGridSpec(
                num_scalar_prefetch=0,
                grid=grid,
                in_specs=[in_spec, in_spec],
                out_specs=pl.BlockSpec((SUBLANES, LANES), lambda i: (i, 0)),
            ),
            compiler_params=compiler_params,
            cost_estimate=cost,
        )(x2, t2)
        total = jnp.sum(partials)
        if reduction == "mean":
            return total / n_valid
        return total

    # reduction == 'none': elementwise output, padding sliced away in wrapper.
    cost = pl.CostEstimate(
        flops=12 * n_valid,
        transcendentals=3 * n_valid,
        bytes_accessed=bytes_in + R * LANES * 4,
    )
    flat = pl.pallas_call(
        functools.partial(_focal_elem_kernel, alpha=float(alpha), gamma=float(gamma)),
        out_shape=jax.ShapeDtypeStruct((R, LANES), jnp.float32),
        grid_spec=pltpu.PrefetchScalarGridSpec(
            num_scalar_prefetch=0,
            grid=grid,
            in_specs=[in_spec, in_spec],
            out_specs=in_spec,
        ),
        compiler_params=compiler_params,
        cost_estimate=cost,
    )(x2, t2)
    return flat.reshape(-1)[:n_valid].reshape(inputs.shape)


def _focal_loss_ref(inputs, targets, alpha=0.25, gamma=2.0, reduction="mean"):
    x = inputs.astype(jnp.float32)
    t = targets.astype(jnp.float32)
    bce = jnp.maximum(x, 0.0) - x * t + jnp.log1p(jnp.exp(-jnp.abs(x)))
    pt = jnp.exp(-bce)
    focal = alpha * (1.0 - pt) ** gamma * bce
    if reduction == "mean":
        return jnp.mean(focal)
    if reduction == "sum":
        return jnp.sum(focal)
    return focal


if __name__ == "__main__":
    key = jax.random.PRNGKey(0)
    k1, k2 = jax.random.split(key)

    # Small NCHW-like shapes: batch=2, channels=4, spatial=16x16 (logits + binary targets).
    shape = (2, 4, 16, 16)
    logits = jax.random.normal(k1, shape, dtype=jnp.float32) * 2.0
    targets = (jax.random.uniform(k2, shape) > 0.5).astype(jnp.float32)

    loss_mean = jax.block_until_ready(
        focal_loss(logits, targets, alpha=0.25, gamma=2.0, reduction="mean"))
    ref_mean = _focal_loss_ref(logits, targets, reduction="mean")
    assert jnp.allclose(loss_mean, ref_mean, rtol=1e-5, atol=1e-6), (loss_mean, ref_mean)

    loss_sum = jax.block_until_ready(
        focal_loss(logits, targets, alpha=0.25, gamma=2.0, reduction="sum"))
    ref_sum = _focal_loss_ref(logits, targets, reduction="sum")
    assert jnp.allclose(loss_sum, ref_sum, rtol=1e-5, atol=1e-5), (loss_sum, ref_sum)

    loss_none = jax.block_until_ready(
        focal_loss(logits, targets, alpha=0.25, gamma=2.0, reduction="none"))
    ref_none = _focal_loss_ref(logits, targets, reduction="none")
    assert jnp.allclose(loss_none, ref_none, rtol=1e-5, atol=1e-6)

    print("KERNEL_OK")
</pallas_src>

<mosaic_0001>
module attributes {stable_mosaic.version = 11 : i64} {
  func.func @_focal_reduce_kernel(%arg0: i32, %arg1: memref<16x128xf32, #tpu.memory_space<vmem>>, %arg2: memref<16x128xf32, #tpu.memory_space<vmem>>, %arg3: memref<8x128xf32, #tpu.memory_space<vmem>>) attributes {dimension_semantics = [#tpu.dimension_semantics<parallel>], iteration_bounds = array<i64: 1>, scalar_prefetch = 0 : i64, scratch_operands = 0 : i64, tpu.core_type = #tpu.core_type<tc>, window_params = [{transform_indices = @transform_0, window_bounds = array<i64: 16, 128>}, {transform_indices = @transform_1, window_bounds = array<i64: 16, 128>}, {transform_indices = @transform_2, window_bounds = array<i64: 8, 128>}]} {
    %c0 = arith.constant 0 : index
    %c0_0 = arith.constant 0 : index
    %0 = vector.load %arg1[%c0, %c0_0] : memref<16x128xf32, #tpu.memory_space<vmem>>, vector<16x128xf32>
    %c0_1 = arith.constant 0 : index
    %c0_2 = arith.constant 0 : index
    %1 = vector.load %arg2[%c0_1, %c0_2] : memref<16x128xf32, #tpu.memory_space<vmem>>, vector<16x128xf32>
    %cst = arith.constant 0.000000e+00 : f32
    %2 = vector.broadcast %cst : f32 to vector<16x128xf32>
    %3 = arith.maximumf %0, %2 : vector<16x128xf32>
    %4 = arith.mulf %0, %1 : vector<16x128xf32>
    %5 = arith.subf %3, %4 : vector<16x128xf32>
    %6 = math.absf %0 : vector<16x128xf32>
    %cst_3 = arith.constant 0.000000e+00 : f32
    %7 = vector.broadcast %cst_3 : f32 to vector<16x128xf32>
    %8 = arith.subf %7, %6 : vector<16x128xf32>
    %9 = math.exp %8 : vector<16x128xf32>
    %10 = math.log1p %9 : vector<16x128xf32>
    %11 = arith.addf %5, %10 : vector<16x128xf32>
    %cst_4 = arith.constant 0.000000e+00 : f32
    %12 = vector.broadcast %cst_4 : f32 to vector<16x128xf32>
    %13 = arith.subf %12, %11 : vector<16x128xf32>
    %14 = math.exp %13 : vector<16x128xf32>
    %cst_5 = arith.constant 1.000000e+00 : f32
    %15 = vector.broadcast %cst_5 : f32 to vector<16x128xf32>
    %16 = arith.subf %15, %14 : vector<16x128xf32>
    %cst_6 = arith.constant 0.000000e+00 : f32
    %17 = vector.broadcast %cst_6 : f32 to vector<16x128xf32>
    %18 = arith.maximumf %16, %17 : vector<16x128xf32>
    %19 = arith.mulf %18, %18 : vector<16x128xf32>
    %cst_7 = arith.constant 2.500000e-01 : f32
    %20 = vector.broadcast %cst_7 : f32 to vector<16x128xf32>
    %21 = arith.mulf %20, %19 : vector<16x128xf32>
    %22 = arith.mulf %21, %11 : vector<16x128xf32>
    %c0_i32 = arith.constant 0 : i32
    %23 = arith.cmpi ne, %arg0, %c0_i32 : i32
    %24 = arith.extui %23 : i1 to i32
    %c0_i32_8 = arith.constant 0 : i32
    %25 = arith.cmpi ne, %24, %c0_i32_8 : i32
    scf.if %25 {
      %29 = vector.shape_cast %22 : vector<16x128xf32> to vector<2x8x128xf32>
      %cst_11 = arith.constant dense<0.000000e+00> : vector<8x128xf32>
      %30 = vector.multi_reduction <add>, %29, %cst_11 [0] : vector<2x8x128xf32> to vector<8x128xf32>
      %c0_12 = arith.constant 0 : index
      %c0_13 = arith.constant 0 : index
      %31 = vector.load %arg3[%c0_12, %c0_13] : memref<8x128xf32, #tpu.memory_space<vmem>>, vector<8x128xf32>
      tpu.vector_store %arg3[%c0_12, %c0_13], %30 {strides = array<i32>} : memref<8x128xf32, #tpu.memory_space<vmem>>, vector<8x128xf32>,
    } else {
    }
    %c0_i32_9 = arith.constant 0 : i32
    %26 = arith.cmpi eq, %arg0, %c0_i32_9 : i32
    %27 = arith.extui %26 : i1 to i32
    %c0_i32_10 = arith.constant 0 : i32
    %28 = arith.cmpi ne, %27, %c0_i32_10 : i32
    scf.if %28 {
      %c2048_i32 = arith.constant 2048 : i32
      %29 = arith.muli %arg0, %c2048_i32 : i32
      %30 = tpu.iota {dimensions = array<i32: 0>} : vector<16x128xi32>
      %31 = tpu.iota {dimensions = array<i32: 1>} : vector<16x128xi32>
      %c128_i32 = arith.constant 128 : i32
      %32 = vector.broadcast %c128_i32 : i32 to vector<16x128xi32>
      %33 = arith.muli %30, %32 : vector<16x128xi32>
      %34 = vector.broadcast %29 : i32 to vector<16x128xi32>
      %35 = arith.addi %34, %33 : vector<16x128xi32>
      %36 = arith.addi %35, %31 : vector<16x128xi32>
      %c2048_i32_11 = arith.constant 2048 : i32
      %37 = vector.broadcast %c2048_i32_11 : i32 to vector<16x128xi32>
      %38 = arith.cmpi slt, %36, %37 : vector<16x128xi32>
      %cst_12 = arith.constant 0.000000e+00 : f32
      %39 = vector.broadcast %cst_12 : f32 to vector<16x128xf32>
      %40 = arith.select %38, %22, %39 : vector<16x128xi1>, vector<16x128xf32>
      %41 = vector.shape_cast %40 : vector<16x128xf32> to vector<2x8x128xf32>
      %cst_13 = arith.constant dense<0.000000e+00> : vector<8x128xf32>
      %42 = vector.multi_reduction <add>, %41, %cst_13 [0] : vector<2x8x128xf32> to vector<8x128xf32>
      %c0_14 = arith.constant 0 : index
      %c0_15 = arith.constant 0 : index
      %43 = vector.load %arg3[%c0_14, %c0_15] : memref<8x128xf32, #tpu.memory_space<vmem>>, vector<8x128xf32>
      tpu.vector_store %arg3[%c0_14, %c0_15], %42 {strides = array<i32>} : memref<8x128xf32, #tpu.memory_space<vmem>>, vector<8x128xf32>,
    } else {
    }
    return
  }
  func.func @transform_0(%arg0: i32) -> (i32, i32) {
    %c0_i32 = arith.constant 0 : i32
    %c0_i32_0 = arith.constant 0 : i32
    return %arg0, %c0_i32 : i32, i32
  }
  func.func @transform_1(%arg0: i32) -> (i32, i32) {
    %c0_i32 = arith.constant 0 : i32
    %c0_i32_0 = arith.constant 0 : i32
    return %arg0, %c0_i32 : i32, i32
  }
  func.func @transform_2(%arg0: i32) -> (i32, i32) {
    %c0_i32 = arith.constant 0 : i32
    %c0_i32_0 = arith.constant 0 : i32
    return %arg0, %c0_i32 : i32, i32
  }
}

</mosaic_0001>

<llo_original>
// kernel: tpu_custom_call.1
$region0: #{tpu_custom_call.1}
  #allocation0 [shape = 'u32[]', space=smem, size = 0x4, offset = 0x4, fixed_abs, tag = 'smem constant byte address 0x4 - core index']
  #allocation1 [shape = 'u32[144,128]{1,0:T(1,128)}', space=vmem, size = 0x12000, scoped, tag = 'internal scratch']
  %s0 = inlined_call_operand.hbm [shape: f32[16,128], index: 0, kind: input, shape index: {}]
  %s1 = inlined_call_operand.hbm [shape: f32[16,128], index: 1, kind: input, shape index: {}]
  %s2 = inlined_call_operand.hbm [shape: f32[8,128], index: 2, kind: output, shape index: {}]
  %s3 = sld [smem:[#allocation0]]
  $region34: #{tpu_custom_call.1} parent=0
    _
  %s5 = ssub.s32 1, %s3
  %s6 = scalar_select 0, %s5, %s3
  $region1: #{tpu_custom_call.1} parent=0
    #allocation2 [shape = 'u8[8192]{0}', space=vmem, size = 0x2000, scoped, tag = 'input window, operand 0, single buffered']
    #allocation3 [shape = 's32[1]{0}', space=sflag, size = 0x4, scoped, tag = 'scoped memory for tpu_custom_call.1']
    #allocation4 [shape = 's32[1]{0}', space=sflag, size = 0x4, scoped, tag = 'scoped memory for tpu_custom_call.1']
    #allocation5 [shape = 'u8[8192]{0}', space=vmem, size = 0x2000, scoped, tag = 'input window, operand 1, single buffered']
    #allocation6 [shape = 's32[1]{0}', space=sflag, size = 0x4, scoped, tag = 'scoped memory for tpu_custom_call.1']
    #allocation7 [shape = 'u8[4096]{0}', space=vmem, size = 0x1000, scoped, tag = 'output window, operand 0, single buffered']
    %7 = vsyncpa [#allocation3], 0
    %8 = vsyncpa [#allocation6], 0
    %9 = vsyncpa [#allocation4], 0
    // Predicated region
    $region2: #{tpu_custom_call.1} parent=1 // pred_check
      _
    $region3: #{tpu_custom_call.1} parent=1 // pred_check_branch
      %11 = sbr.rel (0) target = $region5
    $region4: #{tpu_custom_call.1} parent=1 // pred_region
      %s13 = ssub.s32 256, 256
      %14 = vsyncadd [#allocation3], %s13
      %s15 = sshll.u32 [#allocation2], 4
      %s16 = int_to_ptr.vmem [resolvable:$true] %s15
      %21 = dma.hbm_to_vmem [thread:$0]  %s0, 256, %s16, [#allocation3], 128, 128, 8
    $region5: #{tpu_custom_call.1} parent=1 // pred_fallthru
      _
    // Predicated region
    $region6: #{tpu_custom_call.1} parent=1 // pred_check
      _
    $region7: #{tpu_custom_call.1} parent=1 // pred_check_branch
      %23 = sbr.rel (0) target = $region9
    $region8: #{tpu_custom_call.1} parent=1 // pred_region
      %s25 = ssub.s32 256, 256
      %26 = vsyncadd [#allocation6], %s25
      %s27 = sshll.u32 [#allocation5], 4
      %s28 = int_to_ptr.vmem [resolvable:$true] %s27
      %33 = dma.hbm_to_vmem [thread:$0]  %s1, 256, %s28, [#allocation6], 128, 128, 8
    $region9: #{tpu_custom_call.1} parent=1 // pred_fallthru
      _
    // Predicated region
    $region10: #{tpu_custom_call.1} parent=1 // pred_check
      _
    $region11: #{tpu_custom_call.1} parent=1 // pred_check_branch
      %35 = sbr.rel (0) target = $region13
    $region12: #{tpu_custom_call.1} parent=1 // pred_region
      %36 = dma.done [#allocation3], 256
    $region13: #{tpu_custom_call.1} parent=1 // pred_fallthru
      _
    // Predicated region
    $region14: #{tpu_custom_call.1} parent=1 // pred_check
      _
    $region15: #{tpu_custom_call.1} parent=1 // pred_check_branch
      %38 = sbr.rel (0) target = $region17
    $region16: #{tpu_custom_call.1} parent=1 // pred_region
      %39 = dma.done [#allocation6], 256
    $region17: #{tpu_custom_call.1} parent=1 // pred_fallthru
      _
    %v40 = vld [vmem:[#allocation2] sm:$0xff]
    %v41 = vld [vmem:[#allocation2 + $0x8] sm:$0xff]
    %v42 = vld [vmem:[#allocation5] sm:$0xff]
    %v43 = vld [vmem:[#allocation5 + $0x8] sm:$0xff]
    %v44 = vmax.f32 %v40, 0.0
    %v45 = vmax.f32 %v41, 0.0
    %v46 = vmul.f32 %v40, %v42
    %v47 = vmul.f32 %v41, %v43
    %v48 = vsub.f32 %v44, %v46
    %v49 = vsub.f32 %v45, %v47
    %v50 = vand.u32 2147483647, %v40
    %v51 = vand.u32 2147483647, %v41
    %v52 = vsub.f32 0.0, %v50
    %v53 = vsub.f32 0.0, %v51
    %v54 = vmul.f32 %v52, 1.442695
    %v55 = vpow.pop %v54
    %v56 = vmul.f32 %v53, 1.442695
    %v57 = vpow.pop %v56
    %v58 = vadd.f32 %v55, 1.0
    %v59 = vlog2.pop %v58
    %v60 = vmul.f32 %v59, 0.6931472
    %v61 = vmul.f32 -0.5, %v55
    %v62 = vadd.f32 %v61, 1.0
    %v63 = vmul.f32 %v62, %v55
    %v64 = vand.u32 2147483647, %v55
    %vm65 = vcmp.lt.f32.partialorder %v64, 0.0004427343
    %v66 = vsel %vm65, %v63, %v60
    %v67 = vadd.f32 %v57, 1.0
    %v68 = vlog2.pop %v67
    %v69 = vmul.f32 %v68, 0.6931472
    %v70 = vmul.f32 -0.5, %v57
    %v71 = vadd.f32 %v70, 1.0
    %v72 = vmul.f32 %v71, %v57
    %v73 = vand.u32 2147483647, %v57
    %vm74 = vcmp.lt.f32.partialorder %v73, 0.0004427343
    %v75 = vsel %vm74, %v72, %v69
    %v76 = vadd.f32 %v48, %v66
    %v77 = vadd.f32 %v49, %v75
    %v78 = vsub.f32 0.0, %v76
    %v79 = vsub.f32 0.0, %v77
    %v80 = vmul.f32 %v78, 1.442695
    %v81 = vpow.pop %v80
    %v82 = vmul.f32 %v79, 1.442695
    %v83 = vpow.pop %v82
    %v84 = vsub.f32 1.0, %v81
    %v85 = vsub.f32 1.0, %v83
    %v86 = vmax.f32 %v84, 0.0
    %v87 = vmax.f32 %v85, 0.0
    %v88 = vmul.f32 %v86, %v86
    %v89 = vmul.f32 %v87, %v87
    %v90 = vmul.f32 %v88, 0.25
    %v91 = vmul.f32 %v89, 0.25
    %v92 = vmul.f32 %v90, %v76
    %v93 = vmul.f32 %v91, %v77
    %p94 = scmp.ne.s32.totalorder 0, 0
    // Predicated region
    $region18: #{tpu_custom_call.1} parent=1 // pred_check
      %p95 = pneg %p94
    $region19: #{tpu_custom_call.1} parent=1 // pred_check_branch
      %97 = sbr.rel (%p95) target = $region21
    $region20: #{tpu_custom_call.1} parent=1 // pred_region
      %v98 = vadd.f32 %v92, %v93
      %99 = vst [vmem:[#allocation7] sm:$0xff] %v98
    $region21: #{tpu_custom_call.1} parent=1 // pred_fallthru
      _
    %p100 = scmp.eq.s32.totalorder 0, 0
    // Predicated region
    $region22: #{tpu_custom_call.1} parent=1 // pred_check
      %p101 = pneg %p100
    $region23: #{tpu_custom_call.1} parent=1 // pred_check_branch
      %103 = sbr.rel (%p101) target = $region25
    $region24: #{tpu_custom_call.1} parent=1 // pred_region
      %s104 = smul.u32 0, 2048
      %v105 = vlaneseq
      %v106 = vshrl.u32 %v105, 7
      %v107 = vadd.s32 %v106, 8
      %v108 = vlaneseq
      %v109 = vand.u32 %v108, 127
      %v110 = vmul.u32 %v106, 128
      %v111 = vmul.u32 %v107, 128
      %v112 = vstv %s104
      %v113 = vadd.s32 %v112, %v110
      %v114 = vadd.s32 %v112, %v111
      %v115 = vadd.s32 %v113, %v109
      %v116 = vadd.s32 %v114, %v109
      %vm117 = vcmp.lt.s32.totalorder %v115, 2048
      %vm118 = vcmp.lt.s32.totalorder %v116, 2048
      %v119 = vsel %vm117, %v92, 0.0
      %v120 = vsel %vm118, %v93, 0.0
      %v121 = vadd.f32 %v119, %v120
      %122 = vst [vmem:[#allocation7] sm:$0xff] %v121
    $region25: #{tpu_custom_call.1} parent=1 // pred_fallthru
      _
    // Predicated region
    $region26: #{tpu_custom_call.1} parent=1 // pred_check
      _
    $region27: #{tpu_custom_call.1} parent=1 // pred_check_branch
      %124 = sbr.rel (0) target = $region29
    $region28: #{tpu_custom_call.1} parent=1 // pred_region
      %s126 = ssub.s32 128, 128
      %127 = vsyncadd [#allocation4], %s126
      %s129 = sshll.u32 [#allocation7], 4
      %s130 = int_to_ptr.vmem [resolvable:$true] %s129
      %132 = dma.vmem_to_hbm [thread:$0]  %s130, 128, %s2, [#allocation4]
    $region29: #{tpu_custom_call.1} parent=1 // pred_fallthru
      _
    // Predicated region
    $region30: #{tpu_custom_call.1} parent=1 // pred_check
      _
    $region31: #{tpu_custom_call.1} parent=1 // pred_check_branch
      %134 = sbr.rel (0) target = $region33
    $region32: #{tpu_custom_call.1} parent=1 // pred_region
      %135 = dma.done [#allocation4], 128
    $region33: #{tpu_custom_call.1} parent=1 // pred_fallthru
      _
    %136 = vsyncpa [#allocation3], 1
    %137 = vsyncpa [#allocation6], 1
    %138 = vsyncpa [#allocation4], 1

</llo_original>
